<compile_context>
chip_gen: v7x
topology: tpu7x:2x2x1
jax: 0.10.0
libtpu: 0.0.40
codegen_flags: <defaults>
</compile_context>

<pallas_src>
import functools

import jax
import jax.numpy as jnp
from jax import lax
from jax.experimental import pallas as pl
from jax.experimental.pallas import tpu as pltpu


# --------------------------------------------------------------------------- #
# Helpers
# --------------------------------------------------------------------------- #
def _tile(dim, prefs):
    """Largest preferred tile that divides `dim`, else the full dim.

    Guarantees every BlockSpec dim is either a nice multiple (>=128 lanes /
    8 sublanes) or exactly the full array dim, so Mosaic layout constraints
    are always satisfied and no padded partial blocks ever occur."""
    for t in prefs:
        if dim % t == 0:
            return t
    return dim


def _pick_head_block(num_heads, head_dim):
    """Smallest group of heads whose concatenated width is lane-dense
    (multiple of 128); falls back to all heads (slab == full embed dim)."""
    for hb in range(1, num_heads + 1):
        if num_heads % hb == 0 and (hb * head_dim) % 128 == 0:
            return hb
    return num_heads


# --------------------------------------------------------------------------- #
# Tiled linear kernel:  y = x @ w_t + b      (w_t already [in, out])
# --------------------------------------------------------------------------- #
def _linear_kernel(x_ref, w_ref, b_ref, o_ref, acc_ref, *, compute_dtype):
    @pl.when(pl.program_id(2) == 0)
    def _():
        acc_ref[...] = jnp.zeros_like(acc_ref)

    acc_ref[...] += jnp.dot(
        x_ref[...].astype(compute_dtype),
        w_ref[...].astype(compute_dtype),
        preferred_element_type=jnp.float32,
    )

    @pl.when(pl.program_id(2) == pl.num_programs(2) - 1)
    def _():
        o_ref[...] = (acc_ref[...] + b_ref[...]).astype(o_ref.dtype)


def pallas_linear(x, w_t, b, *, compute_dtype=jnp.float32):
    """x: [M, K]; w_t: [K, N] (pre-transposed nn.Linear weight); b: [N] -> [M, N]."""
    M, K = x.shape
    N = w_t.shape[1]
    tm = _tile(M, (512, 256, 128))
    tn = _tile(N, (512, 256, 128))
    tk = _tile(K, (512, 256, 128))

    kernel = functools.partial(_linear_kernel, compute_dtype=compute_dtype)
    return pl.pallas_call(
        kernel,
        out_shape=jax.ShapeDtypeStruct((M, N), x.dtype),
        grid=(M // tm, N // tn, K // tk),
        in_specs=[
            pl.BlockSpec((tm, tk), lambda i, j, kk: (i, kk)),
            pl.BlockSpec((tk, tn), lambda i, j, kk: (kk, j)),
            pl.BlockSpec((1, tn), lambda i, j, kk: (0, j)),
        ],
        out_specs=pl.BlockSpec((tm, tn), lambda i, j, kk: (i, j)),
        scratch_shapes=[pltpu.VMEM((tm, tn), jnp.float32)],
        compiler_params=pltpu.CompilerParams(
            dimension_semantics=("parallel", "parallel", "arbitrary")
        ),
    )(x, w_t, b.reshape(1, N))


# --------------------------------------------------------------------------- #
# Attention kernels (head-slab layout: q/k/v/out are [B, T, E] column slabs)
# --------------------------------------------------------------------------- #
def _attn_flash_kernel(*refs, scaling, hb, d, has_mask, compute_dtype):
    """Flash-style online softmax, grid = (B, H//hb, T//tq, S//tk)."""
    if has_mask:
        q_ref, k_ref, v_ref, mask_ref, o_ref, m_sc, l_sc, acc_sc = refs
    else:
        q_ref, k_ref, v_ref, o_ref, m_sc, l_sc, acc_sc = refs
        mask_ref = None

    ki = pl.program_id(3)

    @pl.when(ki == 0)
    def _():
        m_sc[...] = jnp.full(m_sc.shape, -jnp.inf, m_sc.dtype)
        l_sc[...] = jnp.zeros(l_sc.shape, l_sc.dtype)
        acc_sc[...] = jnp.zeros(acc_sc.shape, acc_sc.dtype)

    mask = mask_ref[0] if has_mask else None          # [tq, tk], hoisted

    for h in range(hb):                                # small static slab loop
        c0, c1 = h * d, (h + 1) * d
        q = (q_ref[0, :, c0:c1] * scaling).astype(compute_dtype)   # [tq, d]
        k = k_ref[0, :, c0:c1].astype(compute_dtype)               # [tk, d]
        v = v_ref[0, :, c0:c1].astype(compute_dtype)               # [tk, d]

        # contract last dims (no in-kernel k.T)
        s = lax.dot_general(q, k, (((1,), (1,)), ((), ())),
                            preferred_element_type=jnp.float32)    # [tq, tk]
        if has_mask:
            s = s + mask

        m_prev = m_sc[h]                                           # [tq, 1]
        m_new = jnp.maximum(m_prev, jnp.max(s, axis=-1, keepdims=True))
        alpha = jnp.exp(m_prev - m_new)
        p = jnp.exp(s - m_new)
        l_sc[h] = alpha * l_sc[h] + jnp.sum(p, axis=-1, keepdims=True)
        pv = lax.dot_general(p.astype(compute_dtype), v,
                             (((1,), (0,)), ((), ())),
                             preferred_element_type=jnp.float32)   # [tq, d]
        acc_sc[:, c0:c1] = alpha * acc_sc[:, c0:c1] + pv
        m_sc[h] = m_new

    @pl.when(ki == pl.num_programs(3) - 1)
    def _():
        for h in range(hb):
            c0, c1 = h * d, (h + 1) * d
            inv = pl.reciprocal(l_sc[h], approx=True)              # EUP slot
            o_ref[0, :, c0:c1] = (acc_sc[:, c0:c1] * inv).astype(o_ref.dtype)


def _attn_weights_kernel(*refs, scaling, hb, d, has_mask, compute_dtype):
    """Full-S path used only when attention probabilities are requested.
    grid = (B, H//hb, T//tq); writes weights [B, H, T, S] + output [B, T, E]."""
    if has_mask:
        q_ref, k_ref, v_ref, mask_ref, o_ref, w_ref = refs
    else:
        q_ref, k_ref, v_ref, o_ref, w_ref = refs
        mask_ref = None

    mask = mask_ref[0] if has_mask else None          # [tq, S]

    for h in range(hb):
        c0, c1 = h * d, (h + 1) * d
        q = (q_ref[0, :, c0:c1] * scaling).astype(compute_dtype)   # [tq, d]
        k = k_ref[0, :, c0:c1].astype(compute_dtype)               # [S, d]
        v = v_ref[0, :, c0:c1].astype(compute_dtype)               # [S, d]

        s = lax.dot_general(q, k, (((1,), (1,)), ((), ())),
                            preferred_element_type=jnp.float32)    # [tq, S]
        if has_mask:
            s = s + mask
        s_max = jnp.max(s, axis=-1, keepdims=True)
        p = jnp.exp(s - s_max)
        # exact reciprocal here: these weights are returned to the caller
        p = p * pl.reciprocal(jnp.sum(p, axis=-1, keepdims=True), approx=False)

        w_ref[0, h] = p.astype(w_ref.dtype)
        o = lax.dot_general(p.astype(compute_dtype), v, (((1,), (0,)), ((), ())),
                            preferred_element_type=jnp.float32)    # [tq, d]
        o_ref[0, :, c0:c1] = o.astype(o_ref.dtype)


def pallas_attention(q, k, v, attention_mask, scaling, num_heads,
                     *, output_attentions=False, compute_dtype=jnp.float32):
    """q/k/v: [B, T(S), E] (heads concatenated along E). Returns (out, weights)."""
    B, T, E = q.shape
    S = k.shape[1]
    D = E // num_heads
    HB = _pick_head_block(num_heads, D)        # heads per grid slab
    NHB = num_heads // HB
    slab = HB * D

    has_mask = attention_mask is not None
    inputs = [q, k, v]
    if has_mask:
        mask = attention_mask.astype(jnp.float32)
        if mask.ndim == 4:
            mask = jnp.broadcast_to(mask, (B, 1, T, S)).reshape(B, T, S)
        else:
            mask = jnp.broadcast_to(mask, (B, T, S))
        inputs.append(mask)

    if not output_attentions:
        # -------- flash path: KV-tiled, no attn_weights materialized --------
        tq = _tile(T, (256, 128))
        tk = _tile(S, (512, 256, 128))
        kernel = functools.partial(_attn_flash_kernel, scaling=scaling, hb=HB,
                                   d=D, has_mask=has_mask,
                                   compute_dtype=compute_dtype)
        in_specs = [
            pl.BlockSpec((1, tq, slab), lambda b, g, qi, ki: (b, qi, g)),
            pl.BlockSpec((1, tk, slab), lambda b, g, qi, ki: (b, ki, g)),
            pl.BlockSpec((1, tk, slab), lambda b, g, qi, ki: (b, ki, g)),
        ]
        if has_mask:
            in_specs.append(
                pl.BlockSpec((1, tq, tk), lambda b, g, qi, ki: (b, qi, ki)))
        out = pl.pallas_call(
            kernel,
            out_shape=jax.ShapeDtypeStruct((B, T, E), q.dtype),
            grid=(B, NHB, T // tq, S // tk),
            in_specs=in_specs,
            out_specs=pl.BlockSpec((1, tq, slab), lambda b, g, qi, ki: (b, qi, g)),
            scratch_shapes=[
                pltpu.VMEM((HB, tq, 1), jnp.float32),   # running max
                pltpu.VMEM((HB, tq, 1), jnp.float32),   # running sum
                pltpu.VMEM((tq, slab), jnp.float32),    # output accumulator
            ],
            compiler_params=pltpu.CompilerParams(
                dimension_semantics=("parallel", "parallel", "parallel",
                                     "arbitrary")),
        )(*inputs)
        return out, None

    # -------- weights path: full S resident per query tile --------
    tq = _tile(T, (128,))
    kernel = functools.partial(_attn_weights_kernel, scaling=scaling, hb=HB,
                               d=D, has_mask=has_mask,
                               compute_dtype=compute_dtype)
    in_specs = [
        pl.BlockSpec((1, tq, slab), lambda b, g, qi: (b, qi, g)),
        pl.BlockSpec((1, S, slab), lambda b, g, qi: (b, 0, g)),
        pl.BlockSpec((1, S, slab), lambda b, g, qi: (b, 0, g)),
    ]
    if has_mask:
        in_specs.append(pl.BlockSpec((1, tq, S), lambda b, g, qi: (b, qi, 0)))
    out, weights = pl.pallas_call(
        kernel,
        out_shape=(
            jax.ShapeDtypeStruct((B, T, E), q.dtype),
            jax.ShapeDtypeStruct((B, num_heads, T, S), jnp.float32),
        ),
        grid=(B, NHB, T // tq),
        in_specs=in_specs,
        out_specs=[
            pl.BlockSpec((1, tq, slab), lambda b, g, qi: (b, qi, g)),
            pl.BlockSpec((1, HB, tq, S), lambda b, g, qi: (b, g, qi, 0)),
        ],
        compiler_params=pltpu.CompilerParams(
            dimension_semantics=("parallel", "parallel", "parallel")),
    )(*inputs)
    return out, weights


# --------------------------------------------------------------------------- #
# Module-level forward (self-attention, key_value_states=None, no cache)
# --------------------------------------------------------------------------- #
def speech2text_attention_forward(hidden_states, params, num_heads,
                                  attention_mask=None, output_attentions=True,
                                  compute_dtype=jnp.float32):
    B, T, E = hidden_states.shape
    head_dim = E // num_heads
    scaling = head_dim ** (-0.5)

    # Fused QKV projection: weights concatenated + pre-transposed once (in a
    # real model they would be stored this way); x is read from HBM once.
    wqkv_t = jnp.concatenate(
        [params["q_w"], params["k_w"], params["v_w"]], axis=0).T       # [E, 3E]
    bqkv = jnp.concatenate(
        [params["q_b"], params["k_b"], params["v_b"]], axis=0)         # [3E]

    x2d = hidden_states.reshape(B * T, E)
    qkv = pallas_linear(x2d, wqkv_t, bqkv, compute_dtype=compute_dtype)
    qkv = qkv.reshape(B, T, 3, E)
    q, k, v = qkv[:, :, 0], qkv[:, :, 1], qkv[:, :, 2]   # each [B, T, E], no head transpose

    attn_out, attn_weights = pallas_attention(
        q, k, v, attention_mask, scaling, num_heads,
        output_attentions=output_attentions, compute_dtype=compute_dtype)

    out = pallas_linear(attn_out.reshape(B * T, E), params["o_w"].T,
                        params["o_b"], compute_dtype=compute_dtype)
    return out.reshape(B, T, E), attn_weights


# --------------------------------------------------------------------------- #
# Pure-JAX reference (sanity check only)
# --------------------------------------------------------------------------- #
def _reference_forward(hidden_states, params, num_heads, attention_mask=None):
    B, T, E = hidden_states.shape
    D = E // num_heads
    scaling = D ** (-0.5)

    def lin(x, w, b):
        return x @ w.T + b

    q = lin(hidden_states, params["q_w"], params["q_b"])
    k = lin(hidden_states, params["k_w"], params["k_b"])
    v = lin(hidden_states, params["v_w"], params["v_b"])
    q = q.reshape(B, T, num_heads, D).transpose(0, 2, 1, 3)
    k = k.reshape(B, T, num_heads, D).transpose(0, 2, 1, 3)
    v = v.reshape(B, T, num_heads, D).transpose(0, 2, 1, 3)
    s = jnp.einsum("bhqd,bhkd->bhqk", q, k) * scaling
    if attention_mask is not None:
        s = s + attention_mask
    w = jax.nn.softmax(s, axis=-1)
    o = jnp.einsum("bhqk,bhkd->bhqd", w, v)
    o = o.transpose(0, 2, 1, 3).reshape(B, T, E)
    o = lin(o, params["o_w"], params["o_b"])
    return o, w


# --------------------------------------------------------------------------- #
if __name__ == "__main__":
    B, T, E, H = 2, 8, 32, 4  # batch, seq, embed_dim, num_heads (head_dim = 8)

    key = jax.random.PRNGKey(0)
    ks = jax.random.split(key, 10)
    init = lambda kk, shape: (0.02 * jax.random.normal(kk, shape)).astype(jnp.float32)

    params = {
        "q_w": init(ks[0], (E, E)), "q_b": init(ks[1], (E,)),
        "k_w": init(ks[2], (E, E)), "k_b": init(ks[3], (E,)),
        "v_w": init(ks[4], (E, E)), "v_b": init(ks[5], (E,)),
        "o_w": init(ks[6], (E, E)), "o_b": init(ks[7], (E,)),
    }

    hidden_states = jax.random.normal(ks[8], (B, T, E), dtype=jnp.float32)
    # additive attention mask (broadcast over heads), like HF's extended mask
    attention_mask = jnp.where(
        jnp.arange(T)[None, None, None, :] <= jnp.arange(T)[None, None, :, None],
        0.0, -1e9,
    ).astype(jnp.float32) * jnp.ones((B, 1, 1, 1), jnp.float32)

    ref_out, ref_w = _reference_forward(hidden_states, params, H, attention_mask)
    ref_out_nomask, _ = _reference_forward(hidden_states, params, H, None)

    # 1) f32 compute, masked, with attention weights (weights-path kernel)
    out, weights = speech2text_attention_forward(
        hidden_states, params, num_heads=H, attention_mask=attention_mask,
        output_attentions=True)
    jax.block_until_ready((out, weights))
    assert out.shape == (B, T, E) and weights.shape == (B, H, T, T)
    assert jnp.allclose(out, ref_out, rtol=5e-3, atol=1e-4)
    assert jnp.allclose(weights, ref_w, rtol=5e-3, atol=1e-4)

    # 2) f32 compute, masked, flash path (no attn_weights written to HBM)
    out2, w2 = speech2text_attention_forward(
        hidden_states, params, num_heads=H, attention_mask=attention_mask,
        output_attentions=False)
    jax.block_until_ready(out2)
    assert w2 is None
    assert jnp.allclose(out2, ref_out, rtol=5e-3, atol=1e-4)

    # 3) f32 compute, no mask (no zero-mask materialization), flash path
    out3, _ = speech2text_attention_forward(
        hidden_states, params, num_heads=H, attention_mask=None,
        output_attentions=False)
    jax.block_until_ready(out3)
    assert jnp.allclose(out3, ref_out_nomask, rtol=5e-3, atol=1e-4)

    # 4) bf16 MXU operands (f32 accumulation), masked, with weights
    out4, w4 = speech2text_attention_forward(
        hidden_states, params, num_heads=H, attention_mask=attention_mask,
        output_attentions=True, compute_dtype=jnp.bfloat16)
    jax.block_until_ready((out4, w4))
    assert jnp.allclose(out4, ref_out, rtol=5e-2, atol=5e-3)
    assert jnp.allclose(w4, ref_w, rtol=5e-2, atol=5e-3)

    print("KERNEL_OK")
</pallas_src>

<mosaic_0001>
module attributes {stable_mosaic.version = 11 : i64} {
  func.func @_linear_kernel(%arg0: i32, %arg1: i32, %arg2: i32, %arg3: memref<16x32xf32, #tpu.memory_space<vmem>>, %arg4: memref<32x96xf32, #tpu.memory_space<vmem>>, %arg5: memref<1x96xf32, #tpu.memory_space<vmem>>, %arg6: memref<16x96xf32, #tpu.memory_space<vmem>>, %arg7: memref<16x96xf32, #tpu.memory_space<vmem>>) attributes {dimension_semantics = [#tpu.dimension_semantics<parallel>, #tpu.dimension_semantics<parallel>, #tpu.dimension_semantics<arbitrary>], iteration_bounds = array<i64: 1, 1, 1>, scalar_prefetch = 0 : i64, scratch_operands = 1 : i64, tpu.core_type = #tpu.core_type<tc>, window_params = [{transform_indices = @transform_0, window_bounds = array<i64: 16, 32>}, {transform_indices = @transform_1, window_bounds = array<i64: 32, 96>}, {transform_indices = @transform_2, window_bounds = array<i64: 1, 96>}, {transform_indices = @transform_3, window_bounds = array<i64: 16, 96>}]} {
    %c0_i32 = arith.constant 0 : i32
    %0 = arith.cmpi eq, %arg2, %c0_i32 : i32
    %1 = arith.extui %0 : i1 to i32
    %c0_i32_0 = arith.constant 0 : i32
    %2 = arith.cmpi ne, %1, %c0_i32_0 : i32
    scf.if %2 {
      %cst_10 = arith.constant 0.000000e+00 : f32
      %12 = vector.broadcast %cst_10 : f32 to vector<16x96xf32>
      %c0_11 = arith.constant 0 : index
      %c0_12 = arith.constant 0 : index
      %13 = vector.load %arg7[%c0_11, %c0_12] : memref<16x96xf32, #tpu.memory_space<vmem>>, vector<16x96xf32>
      tpu.vector_store %arg7[%c0_11, %c0_12], %12 {strides = array<i32>} : memref<16x96xf32, #tpu.memory_space<vmem>>, vector<16x96xf32>,
    } else {
    }
    %c0 = arith.constant 0 : index
    %c0_1 = arith.constant 0 : index
    %3 = vector.load %arg7[%c0, %c0_1] : memref<16x96xf32, #tpu.memory_space<vmem>>, vector<16x96xf32>
    %c0_2 = arith.constant 0 : index
    %c0_3 = arith.constant 0 : index
    %4 = vector.load %arg3[%c0_2, %c0_3] : memref<16x32xf32, #tpu.memory_space<vmem>>, vector<16x32xf32>
    %c0_4 = arith.constant 0 : index
    %c0_5 = arith.constant 0 : index
    %5 = vector.load %arg4[%c0_4, %c0_5] : memref<32x96xf32, #tpu.memory_space<vmem>>, vector<32x96xf32>
    %cst = arith.constant dense<0.000000e+00> : vector<16x96xf32>
    %6 = tpu.matmul %4, %5, %cst {dimension_numbers = #tpu.dot_dimension_numbers<[1], [0], [0], [1], [0, 0, 1, 1], [], []>} : vector<16x32xf32>, vector<32x96xf32>, vector<16x96xf32> -> vector<16x96xf32>
    %7 = arith.addf %3, %6 : vector<16x96xf32>
    %c0_6 = arith.constant 0 : index
    %c0_7 = arith.constant 0 : index
    %8 = vector.load %arg7[%c0_6, %c0_7] : memref<16x96xf32, #tpu.memory_space<vmem>>, vector<16x96xf32>
    tpu.vector_store %arg7[%c0_6, %c0_7], %7 {strides = array<i32>} : memref<16x96xf32, #tpu.memory_space<vmem>>, vector<16x96xf32>,
    %c0_i32_8 = arith.constant 0 : i32
    %9 = arith.cmpi eq, %arg2, %c0_i32_8 : i32
    %10 = arith.extui %9 : i1 to i32
    %c0_i32_9 = arith.constant 0 : i32
    %11 = arith.cmpi ne, %10, %c0_i32_9 : i32
    scf.if %11 {
      %c0_10 = arith.constant 0 : index
      %c0_11 = arith.constant 0 : index
      %12 = vector.load %arg7[%c0_10, %c0_11] : memref<16x96xf32, #tpu.memory_space<vmem>>, vector<16x96xf32>
      %c0_12 = arith.constant 0 : index
      %c0_13 = arith.constant 0 : index
      %13 = vector.load %arg5[%c0_12, %c0_13] : memref<1x96xf32, #tpu.memory_space<vmem>>, vector<1x96xf32>
      %14 = vector.broadcast %13 : vector<1x96xf32> to vector<16x96xf32>
      %15 = arith.addf %12, %14 : vector<16x96xf32>
      %c0_14 = arith.constant 0 : index
      %c0_15 = arith.constant 0 : index
      %16 = vector.load %arg6[%c0_14, %c0_15] : memref<16x96xf32, #tpu.memory_space<vmem>>, vector<16x96xf32>
      tpu.vector_store %arg6[%c0_14, %c0_15], %15 {strides = array<i32>} : memref<16x96xf32, #tpu.memory_space<vmem>>, vector<16x96xf32>,
    } else {
    }
    return
  }
  func.func @transform_0(%arg0: i32, %arg1: i32, %arg2: i32) -> (i32, i32) {
    %c0_i32 = arith.constant 0 : i32
    return %arg0, %arg2 : i32, i32
  }
  func.func @transform_1(%arg0: i32, %arg1: i32, %arg2: i32) -> (i32, i32) {
    %c0_i32 = arith.constant 0 : i32
    return %arg2, %arg1 : i32, i32
  }
  func.func @transform_2(%arg0: i32, %arg1: i32, %arg2: i32) -> (i32, i32) {
    %c0_i32 = arith.constant 0 : i32
    %c0_i32_0 = arith.constant 0 : i32
    return %c0_i32, %arg1 : i32, i32
  }
  func.func @transform_3(%arg0: i32, %arg1: i32, %arg2: i32) -> (i32, i32) {
    %c0_i32 = arith.constant 0 : i32
    return %arg0, %arg1 : i32, i32
  }
}

</mosaic_0001>

<llo_original>
// kernel: tpu_custom_call.1
$region0: #{tpu_custom_call.1}
  #allocation0 [shape = 'u32[]', space=smem, size = 0x4, offset = 0x4, fixed_abs, tag = 'smem constant byte address 0x4 - core index']
  #allocation1 [shape = 'u32[144,128]{1,0:T(1,128)}', space=vmem, size = 0x12000, scoped, tag = 'internal scratch']
  #allocation2 [shape = 'f32[16,96]{1,0:T(8,128)}', space=vmem, size = 0x2000, scoped, tag = 'scratch operand']
  %s0 = inlined_call_operand.hbm [shape: f32[16,32], index: 0, kind: input, shape index: {}]
  %s1 = inlined_call_operand.hbm [shape: f32[32,96], index: 1, kind: input, shape index: {}]
  %s2 = inlined_call_operand.vmem [shape: f32[1,96], index: 2, kind: input, shape index: {}]
  %s3 = inlined_call_operand.hbm [shape: f32[16,96], index: 3, kind: output, shape index: {}]
  %s4 = sld [smem:[#allocation0]]
  $region38: #{tpu_custom_call.1} parent=0
    _
  %s6 = ssub.s32 1, %s4
  %s7 = scalar_select 0, %s6, %s4
  $region1: #{tpu_custom_call.1} parent=0
    #allocation3 [shape = 'u8[8192]{0}', space=vmem, size = 0x2000, scoped, tag = 'input window, operand 0, single buffered']
    #allocation4 [shape = 's32[1]{0}', space=sflag, size = 0x4, scoped, tag = 'scoped memory for tpu_custom_call.1']
    #allocation5 [shape = 's32[1]{0}', space=sflag, size = 0x4, scoped, tag = 'scoped memory for tpu_custom_call.1']
    #allocation6 [shape = 'u8[16384]{0}', space=vmem, size = 0x4000, scoped, tag = 'input window, operand 1, single buffered']
    #allocation7 [shape = 's32[1]{0}', space=sflag, size = 0x4, scoped, tag = 'scoped memory for tpu_custom_call.1']
    #allocation8 [shape = 'u8[8192]{0}', space=vmem, size = 0x2000, scoped, tag = 'output window, operand 0, single buffered']
    %8 = vsyncpa [#allocation4], 0
    %9 = vsyncpa [#allocation7], 0
    %10 = vsyncpa [#allocation5], 0
    // Predicated region
    $region2: #{tpu_custom_call.1} parent=1 // pred_check
      _
    $region3: #{tpu_custom_call.1} parent=1 // pred_check_branch
      %12 = sbr.rel (0) target = $region5
    $region4: #{tpu_custom_call.1} parent=1 // pred_region
      %s14 = ssub.s32 256, 256
      %15 = vsyncadd [#allocation4], %s14
      %s16 = sshll.u32 [#allocation3], 4
      %s17 = int_to_ptr.vmem [resolvable:$true] %s16
      %22 = dma.hbm_to_vmem [thread:$0]  %s0, 256, %s17, [#allocation4], 128, 128, 8
    $region5: #{tpu_custom_call.1} parent=1 // pred_fallthru
      _
    // Predicated region
    $region6: #{tpu_custom_call.1} parent=1 // pred_check
      _
    $region7: #{tpu_custom_call.1} parent=1 // pred_check_branch
      %24 = sbr.rel (0) target = $region9
    $region8: #{tpu_custom_call.1} parent=1 // pred_region
      %s26 = ssub.s32 512, 512
      %27 = vsyncadd [#allocation7], %s26
      %s28 = sshll.u32 [#allocation6], 4
      %s29 = int_to_ptr.vmem [resolvable:$true] %s28
      %34 = dma.hbm_to_vmem [thread:$0]  %s1, 512, %s29, [#allocation7], 128, 128, 8
    $region9: #{tpu_custom_call.1} parent=1 // pred_fallthru
      _
    // Predicated region
    $region10: #{tpu_custom_call.1} parent=1 // pred_check
      _
    $region11: #{tpu_custom_call.1} parent=1 // pred_check_branch
      %36 = sbr.rel (0) target = $region13
    $region12: #{tpu_custom_call.1} parent=1 // pred_region
      _
    $region13: #{tpu_custom_call.1} parent=1 // pred_fallthru
      _
    // Predicated region
    $region14: #{tpu_custom_call.1} parent=1 // pred_check
      _
    $region15: #{tpu_custom_call.1} parent=1 // pred_check_branch
      %38 = sbr.rel (0) target = $region17
    $region16: #{tpu_custom_call.1} parent=1 // pred_region
      %39 = dma.done [#allocation4], 256
    $region17: #{tpu_custom_call.1} parent=1 // pred_fallthru
      _
    // Predicated region
    $region18: #{tpu_custom_call.1} parent=1 // pred_check
      _
    $region19: #{tpu_custom_call.1} parent=1 // pred_check_branch
      %41 = sbr.rel (0) target = $region21
    $region20: #{tpu_custom_call.1} parent=1 // pred_region
      %42 = dma.done [#allocation7], 512
    $region21: #{tpu_custom_call.1} parent=1 // pred_fallthru
      _
    %p43 = scmp.eq.s32.totalorder 0, 0
    // Predicated region
    $region22: #{tpu_custom_call.1} parent=1 // pred_check
      %p44 = pneg %p43
    $region23: #{tpu_custom_call.1} parent=1 // pred_check_branch
      %46 = sbr.rel (%p44) target = $region25
    $region24: #{tpu_custom_call.1} parent=1 // pred_region
      %vm47 = vcmask 785408
      %48 = vst.msk [vmem:[#allocation2] sm:$0xff] %vm47, 0.0
      %49 = vst.msk [vmem:[#allocation2 + $0x8] sm:$0xff] %vm47, 0.0
    $region25: #{tpu_custom_call.1} parent=1 // pred_fallthru
      _
    %v50 = vld [vmem:[#allocation2] sm:$0xff]
    %v51 = vld [vmem:[#allocation2 + $0x8] sm:$0xff]
    %v52 = vld [vmem:[#allocation3] sm:$0xff]
    %v53 = vld [vmem:[#allocation3 + $0x8] sm:$0xff]
    %v54 = vld [vmem:[#allocation6] sm:$0xff]
    %v55 = vld [vmem:[#allocation6 + $0x8] sm:$0xff]
    %v56 = vld [vmem:[#allocation6 + $0x10] sm:$0xff]
    %v57 = vld [vmem:[#allocation6 + $0x18] sm:$0xff]
    %vm58 = vcmask 261120
    %v60 = vsel %vm58, %v52, 0
    %v63 = vsel %vm58, %v53, 0
    %65 = vmatprep.subr.mxu0 0.0
    %66 = vmatpush1.msra.mxu0 %v54
    %67 = vmatprep.subr.mxu0 0.0
    %68 = vmatpush1.msra.mxu0 %v55
    %69 = vmatprep.subr.mxu0 0.0
    %70 = vmatpush1.msra.mxu0 %v56
    %71 = vmatprep.subr.mxu0 0.0
    %72 = vmatpush1.msra.mxu0 %v57
    %73 = vmatprep.subr.mxu0 0.0
    %74 = vmatpush1.msra.mxu0 0.0
    %75 = vmatprep.subr.mxu0 0.0
    %76 = vmatpush1.msra.mxu0 0.0
    %77 = vmatprep.subr.mxu0 0.0
    %78 = vmatpush1.msra.mxu0 0.0
    %79 = vmatprep.subr.mxu0 0.0
    %80 = vmatpush1.msra.mxu0 0.0
    %81 = vmatprep.subr.mxu0 0.0
    %82 = vmatpush1.msra.mxu0 0.0
    %83 = vmatprep.subr.mxu0 0.0
    %84 = vmatpush1.msra.mxu0 0.0
    %85 = vmatprep.subr.mxu0 0.0
    %86 = vmatpush1.msra.mxu0 0.0
    %87 = vmatprep.subr.mxu0 0.0
    %88 = vmatpush1.msra.mxu0 0.0
    %89 = vmatprep.subr.mxu0 0.0
    %90 = vmatpush1.msra.mxu0 0.0
    %91 = vmatprep.subr.mxu0 0.0
    %92 = vmatpush1.msra.mxu0 0.0
    %93 = vmatprep.subr.mxu0 0.0
    %94 = vmatpush1.msra.mxu0 0.0
    %95 = vmatprep.subr.mxu0 0.0
    %96 = vmatpush1.msra.mxu0 0.0
    %97 = vmatprep.subr.mxu0 0.0
    %98 = vmatpush1.msra.mxu0 0.0
    %99 = vmatprep.subr.mxu0 0.0
    %100 = vmatpush1.msra.mxu0 0.0
    %101 = vmatprep.subr.mxu0 0.0
    %102 = vmatpush1.msra.mxu0 0.0
    %103 = vmatprep.subr.mxu0 0.0
    %104 = vmatpush1.msra.mxu0 0.0
    %105 = vmatprep.subr.mxu0 0.0
    %106 = vmatpush1.msra.mxu0 0.0
    %107 = vmatprep.subr.mxu0 0.0
    %108 = vmatpush1.msra.mxu0 0.0
    %109 = vmatprep.subr.mxu0 0.0
    %110 = vmatpush1.msra.mxu0 0.0
    %111 = vmatprep.subr.mxu0 0.0
    %112 = vmatpush1.msra.mxu0 0.0
    %113 = vmatprep.subr.mxu0 0.0
    %114 = vmatpush1.msra.mxu0 0.0
    %115 = vmatprep.subr.mxu0 0.0
    %116 = vmatpush1.msra.mxu0 0.0
    %117 = vmatprep.subr.mxu0 0.0
    %118 = vmatpush1.msra.mxu0 0.0
    %119 = vmatprep.subr.mxu0 0.0
    %120 = vmatpush1.msra.mxu0 0.0
    %121 = vmatprep.subr.mxu0 0.0
    %122 = vmatpush1.msra.mxu0 0.0
    %123 = vmatprep.subr.mxu0 0.0
    %124 = vmatpush1.msra.mxu0 0.0
    %125 = vmatprep.subr.mxu0 0.0
    %126 = vmatpush1.msra.mxu0 0.0
    %127 = vmatprep.subr.mxu0 0.0
    %128 = vmatpush1.msra.mxu0 0.0
    %129 = vmatprep.mubr.f32.mxu0 0.0
    %130 = vmatmul.mubr.f32.gmra.mrb[0].mxu0 %v60
    %v131 = vpop.f32.mrb[0].mxu0
    %v132 = vadd.f32 0.0, %v131
    %v133 = vpop.f32.mrb[0].mxu0
    %134 = vmatprep.mubr.f32.mxu0 0.0
    %135 = vmatmul.mubr.f32.gmra.mrb[0].mxu0 %v63
    %v136 = vpop.f32.mrb[0].mxu0
    %v137 = vadd.f32 0.0, %v136
    %v138 = vpop.f32.mrb[0].mxu0
    %139 = vdwg.mxu0
    %v140 = vadd.f32 %v50, %v132
    %v141 = vadd.f32 %v51, %v137
    %vm142 = vcmask 785408
    %143 = vst.msk [vmem:[#allocation2] sm:$0xff] %vm142, %v140
    %144 = vst.msk [vmem:[#allocation2 + $0x8] sm:$0xff] %vm142, %v141
    // Predicated region
    $region26: #{tpu_custom_call.1} parent=1 // pred_check
      %p145 = pneg %p43
    $region27: #{tpu_custom_call.1} parent=1 // pred_check_branch
      %147 = sbr.rel (%p145) target = $region29
    $region28: #{tpu_custom_call.1} parent=1 // pred_region
      %v148 = vld [vmem:[#allocation2] sm:$0xff]
      %v149 = vld [vmem:[#allocation2 + $0x8] sm:$0xff]
      %v150 = vld [vmem:[%s2] sm:$0x1]
      %v152 = vlaneseq
      %v153 = vshrl.u32 %v152, 7
      %v154 = vsub.s32 0, %v153
      %v155 = vrot.slane %v150, %v154
      %v157 = vadd.f32 %v148, %v155
      %v158 = vadd.f32 %v149, %v155
      %159 = vst.msk [vmem:[#allocation8] sm:$0xff] %vm142, %v157
      %160 = vst.msk [vmem:[#allocation8 + $0x8] sm:$0xff] %vm142, %v158
    $region29: #{tpu_custom_call.1} parent=1 // pred_fallthru
      _
    // Predicated region
    $region30: #{tpu_custom_call.1} parent=1 // pred_check
      _
    $region31: #{tpu_custom_call.1} parent=1 // pred_check_branch
      %162 = sbr.rel (0) target = $region33
    $region32: #{tpu_custom_call.1} parent=1 // pred_region
      %s164 = ssub.s32 256, 256
      %165 = vsyncadd [#allocation5], %s164
      %s166 = sshll.u32 [#allocation8], 4
      %s167 = int_to_ptr.vmem [resolvable:$true] %s166
      %172 = dma.vmem_to_hbm [thread:$0]  %s167, 256, %s3, [#allocation5], 128, 128, 8
    $region33: #{tpu_custom_call.1} parent=1 // pred_fallthru
      _
    // Predicated region
    $region34: #{tpu_custom_call.1} parent=1 // pred_check
      _
    $region35: #{tpu_custom_call.1} parent=1 // pred_check_branch
      %174 = sbr.rel (0) target = $region37
    $region36: #{tpu_custom_call.1} parent=1 // pred_region
      %175 = dma.done [#allocation5], 256
    $region37: #{tpu_custom_call.1} parent=1 // pred_fallthru
      _
    %176 = vsyncpa [#allocation4], 1
    %177 = vsyncpa [#allocation7], 1
    %178 = vsyncpa [#allocation5], 1

</llo_original>
